<compile_context>
chip_gen: v5e
topology: v5e:2x2
jax: 0.10.0
libtpu: 0.0.40
codegen_flags: <defaults>
</compile_context>

<pallas_src>
import jax
import jax.numpy as jnp
import numpy as np
from jax.experimental import pallas as pl
from jax.experimental.pallas import tpu as pltpu


def _round_up(x, m):
    return (x + m - 1) // m * m


def _has_buffered():
    return hasattr(pl, "Buffered")


def _spec(shape, index_map, n_buf=None):
    """BlockSpec; optionally request an explicit pipeline buffer count."""
    if n_buf is not None and _has_buffered():
        try:
            return pl.BlockSpec(shape, index_map, pipeline_mode=pl.Buffered(n_buf))
        except TypeError:   # older JAX without the pipeline_mode kwarg
            pass
    return pl.BlockSpec(shape, index_map)


def _pick_vmem_limit():
    """Chip-aware scoped-VMEM budget (<=48 MiB on v7x, up to 96 MiB on v5e/v6e)."""
    cap = 64 * 1024 * 1024          # conservative fallback (safe on every chip)
    try:
        cap = pltpu.get_tpu_info().vmem_capacity_bytes
    except Exception:
        pass
    return int(min(cap * 3 // 4, 96 * 1024 * 1024))


# ----------------------------- kernels --------------------------------------


def _project_kernel(feat_ref, norm_ref, w_ref, h_ref):
    # h[i-block] = (feat[i-block] * norm[i-block]) @ W      (bf16 output)
    x = feat_ref[...] * norm_ref[...]
    h_ref[...] = jnp.dot(x, w_ref[...],
                         preferred_element_type=jnp.float32).astype(h_ref.dtype)


def _agg_project_first_kernel(adjT_ref, h_ref, b_ref, out_ref):
    # out[i-block] = sum_k adjT[i-block, k-block] @ h[k-block] + bias
    # out block index is constant over k -> it is the VMEM-resident accumulator.
    k = pl.program_id(1)
    tk = adjT_ref.shape[1]

    @pl.when(k == 0)
    def _():
        out_ref[...] = jnp.zeros_like(out_ref)

    a = adjT_ref[...].astype(jnp.bfloat16)          # int8 (exact 0/1) -> bf16
    if h_ref.shape[0] == tk:                        # h streamed per k-block
        h_blk = h_ref[...]
    else:                                           # full h resident in VMEM
        start = pl.multiple_of(k * tk, 128)
        h_blk = h_ref[pl.ds(start, tk), :]
    out_ref[...] += jnp.dot(a, h_blk, preferred_element_type=jnp.float32)

    @pl.when(k == pl.num_programs(1) - 1)
    def _():
        out_ref[...] += b_ref[...]


def _agg_project_last_kernel(adjT_ref, x_ref, w_ref, b_ref, out_ref, acc_ref):
    # acc[i-block] = sum_k adjT[i-block, k-block] @ x[k-block]   (x = feat*norm, bf16)
    # out[i-block] = acc[i-block] @ W + bias                      (k == last)
    k = pl.program_id(1)
    tk = adjT_ref.shape[1]

    @pl.when(k == 0)
    def _():
        acc_ref[...] = jnp.zeros_like(acc_ref)

    a = adjT_ref[...].astype(jnp.bfloat16)
    if x_ref.shape[0] == tk:                        # x streamed per k-block
        x_blk = x_ref[...]
    else:                                           # full x resident in VMEM
        start = pl.multiple_of(k * tk, 128)
        x_blk = x_ref[pl.ds(start, tk), :]
    acc_ref[...] += jnp.dot(a, x_blk, preferred_element_type=jnp.float32)

    @pl.when(k == pl.num_programs(1) - 1)
    def _():
        out_ref[...] = (jnp.dot(acc_ref[...], w_ref[...],
                                preferred_element_type=jnp.float32) + b_ref[...])


# ----------------------------- wrapper --------------------------------------


def graph_conv(adj, feat, weight, bias, *, alpha, beta):
    assert abs(alpha + beta - 1.0) < 1e-6, "alpha + beta must equal 1"
    n, in_feats = feat.shape
    out_feats = weight.shape[1]
    in_gt_out = in_feats > out_feats

    feat = feat.astype(jnp.float32)
    weight = weight.astype(jnp.float32)
    bias = bias.astype(jnp.float32)

    # ---- tiling: row tile so grid_i >= 2 on medium graphs (v7x has 2 TCs) ----
    n128 = _round_up(n, 128)
    if n128 <= 256:
        tm = 128
    elif n128 <= 1024:
        tm = 256
    else:
        tm = 512
    tk = tm
    n_pad = _round_up(n, tm)
    fin_pad = _round_up(in_feats, 128)
    fout_pad = _round_up(out_feats, 128)

    # ---- adjacency prologue: the f32 adjacency is read exactly once ----------
    # int8 storage is exact for 0/1 edges; degrees come from the compact copy.
    # TODO(synk): for real-valued edge weights keep the adjacency in bf16/f32.
    # TODO(synk): when the same graph is reused across layers, hoist adj_t /
    #             norm computation out of graph_conv and pass them in.
    adj_i8 = adj.astype(jnp.int8)
    in_deg = jnp.maximum(jnp.sum(adj_i8, axis=0, dtype=jnp.int32), 1).astype(jnp.float32)
    out_deg = jnp.maximum(jnp.sum(adj_i8, axis=1, dtype=jnp.int32), 1).astype(jnp.float32)
    if alpha == 0.5 and beta == 0.5:
        norm = jax.lax.rsqrt(in_deg * out_deg)          # cheaper than two pows
    else:
        norm = 1.0 / (in_deg ** alpha * out_deg ** beta)
    norm = norm[:, None]                                 # [N, 1] f32

    adj_t = jnp.pad(adj_i8.T, ((0, n_pad - n), (0, n_pad - n)))       # int8
    feat_p = jnp.pad(feat, ((0, n_pad - n), (0, fin_pad - in_feats)))
    norm_p = jnp.pad(norm, ((0, n_pad - n), (0, 0)))
    w_p = jnp.pad(weight, ((0, fin_pad - in_feats), (0, fout_pad - out_feats)))
    b_p = jnp.pad(bias.reshape(1, -1), ((0, 0), (0, fout_pad - out_feats)))

    grid_i = n_pad // tm
    grid_k = n_pad // tk
    vmem_limit = _pick_vmem_limit()
    const_bufs = 1 if _has_buffered() else 2             # buffers on constant operands
    main_params = pltpu.CompilerParams(
        dimension_semantics=("parallel", "arbitrary"),
        vmem_limit_bytes=vmem_limit)

    if in_gt_out:
        # (1) project first: h = (feat * norm) @ W -> bf16 [n_pad, fout_pad].
        #     Shrink the prologue row tile if a wide in_feats would blow VMEM.
        tm_proj = tm
        while tm_proj > 128 and (
                2 * tm_proj * fin_pad * 4               # double-buffered feat block
                + const_bufs * fin_pad * fout_pad * 4   # weight
                + 2 * tm_proj * fout_pad * 2            # bf16 h output block
                + 2 * tm_proj * 4) > int(vmem_limit * 0.8):
            tm_proj //= 2
        h = pl.pallas_call(
            _project_kernel,
            out_shape=jax.ShapeDtypeStruct((n_pad, fout_pad), jnp.bfloat16),
            grid=(n_pad // tm_proj,),
            in_specs=[
                pl.BlockSpec((tm_proj, fin_pad), lambda i: (i, 0)),
                pl.BlockSpec((tm_proj, 1), lambda i: (i, 0)),
                _spec((fin_pad, fout_pad), lambda i: (0, 0), n_buf=1),
            ],
            out_specs=pl.BlockSpec((tm_proj, fout_pad), lambda i: (i, 0)),
            compiler_params=pltpu.CompilerParams(
                dimension_semantics=("parallel",),
                vmem_limit_bytes=vmem_limit),
        )(feat_p, norm_p, w_p)

        # (2) aggregate: out = adj^T @ h + bias, streaming int8 adj tiles.
        #     bf16 h stays fully VMEM-resident whenever it fits (single
        #     buffered), so the inner loop only DMAs adjacency tiles.
        h_bytes = n_pad * fout_pad * 2
        if h_bytes * const_bufs <= vmem_limit // 2:
            h_spec = _spec((n_pad, fout_pad), lambda i, k: (0, 0), n_buf=1)
        else:
            h_spec = pl.BlockSpec((tk, fout_pad), lambda i, k: (k, 0))
        out_pad = pl.pallas_call(
            _agg_project_first_kernel,
            out_shape=jax.ShapeDtypeStruct((n_pad, fout_pad), jnp.float32),
            grid=(grid_i, grid_k),
            in_specs=[
                pl.BlockSpec((tm, tk), lambda i, k: (i, k)),
                h_spec,
                _spec((1, fout_pad), lambda i, k: (0, 0), n_buf=1),
            ],
            out_specs=pl.BlockSpec((tm, fout_pad), lambda i, k: (i, 0)),
            compiler_params=main_params,
        )(adj_t, h, b_p)
    else:
        # aggregate first: feat*norm is pre-fused and pre-cast to bf16 in the
        # wrapper (the MXU consumes it in bf16 anyway), VMEM-resident if it fits.
        x_p = (feat_p * norm_p).astype(jnp.bfloat16)
        x_bytes = n_pad * fin_pad * 2
        if x_bytes * const_bufs <= vmem_limit // 2:
            x_spec = _spec((n_pad, fin_pad), lambda i, k: (0, 0), n_buf=1)
        else:
            x_spec = pl.BlockSpec((tk, fin_pad), lambda i, k: (k, 0))
        out_pad = pl.pallas_call(
            _agg_project_last_kernel,
            out_shape=jax.ShapeDtypeStruct((n_pad, fout_pad), jnp.float32),
            grid=(grid_i, grid_k),
            in_specs=[
                pl.BlockSpec((tm, tk), lambda i, k: (i, k)),
                x_spec,
                _spec((fin_pad, fout_pad), lambda i, k: (0, 0), n_buf=1),
                _spec((1, fout_pad), lambda i, k: (0, 0), n_buf=1),
            ],
            out_specs=pl.BlockSpec((tm, fout_pad), lambda i, k: (i, 0)),
            scratch_shapes=[pltpu.VMEM((tm, fin_pad), jnp.float32)],
            compiler_params=main_params,
        )(adj_t, x_p, w_p, b_p)

    return out_pad[:n, :out_feats]


def reference(adj, feat, weight, bias, *, alpha, beta):
    in_deg = jnp.maximum(jnp.sum(adj, axis=0), 1.0)
    out_deg = jnp.maximum(jnp.sum(adj, axis=1), 1.0)
    norm = 1.0 / (in_deg ** alpha * out_deg ** beta)
    feat = feat * norm[:, None]
    if feat.shape[1] > weight.shape[1]:
        rst = adj.T @ (feat @ weight)
    else:
        rst = (adj.T @ feat) @ weight
    return rst + bias[None, :]


if __name__ == "__main__":
    alpha, beta = 0.5, 0.5

    def make_case(key, n, in_feats, out_feats):
        k_adj, k_feat, k_w = jax.random.split(key, 3)
        # Synthetic graph: random edges + self-loops (no 0-in-degree nodes).
        adj = jax.random.bernoulli(k_adj, p=0.3, shape=(n, n)).astype(jnp.float32)
        adj = jnp.maximum(adj, jnp.eye(n, dtype=jnp.float32))
        feat = jax.random.normal(k_feat, (n, in_feats), dtype=jnp.float32)
        bound = float(np.sqrt(6.0 / (in_feats + out_feats)))   # xavier_uniform_
        weight = jax.random.uniform(k_w, (in_feats, out_feats),
                                    minval=-bound, maxval=bound, dtype=jnp.float32)
        bias = jnp.zeros((out_feats,), dtype=jnp.float32)
        return adj, feat, weight, bias

    key = jax.random.PRNGKey(0)
    k1, k2, k3, k4 = jax.random.split(key, 4)

    # The MXU is fed bf16 (with f32 accumulation), so compare against the f32
    # reference with a bf16-appropriate tolerance.
    # TODO(synk): activation / weight=None / bias=None / explicit edge_weight
    # variants of the module are not exercised (defaults implemented).
    cases = [
        ("project_first_small",   make_case(k1, 16, 32, 8)),
        ("aggregate_first_small", make_case(k2, 16, 8, 32)),
        ("project_first_tiled",   make_case(k3, 640, 32, 8)),
        ("aggregate_first_tiled", make_case(k4, 640, 8, 32)),
    ]
    for name, (adj, feat, weight, bias) in cases:
        out = jax.block_until_ready(
            graph_conv(adj, feat, weight, bias, alpha=alpha, beta=beta))
        ref = reference(adj, feat, weight, bias, alpha=alpha, beta=beta)
        np.testing.assert_allclose(np.asarray(out), np.asarray(ref),
                                   rtol=2e-2, atol=2e-2, err_msg=name)

    print("KERNEL_OK")
</pallas_src>

<mosaic_0001>
module attributes {stable_mosaic.version = 11 : i64} {
  func.func @_project_kernel(%arg0: i32, %arg1: memref<128x128xf32, #tpu.memory_space<vmem>>, %arg2: memref<128x1xf32, #tpu.memory_space<vmem>>, %arg3: memref<128x128xf32, #tpu.memory_space<vmem>>, %arg4: memref<128x128xbf16, #tpu.memory_space<vmem>>) attributes {dimension_semantics = [#tpu.dimension_semantics<parallel>], iteration_bounds = array<i64: 1>, scalar_prefetch = 0 : i64, scratch_operands = 0 : i64, tpu.core_type = #tpu.core_type<tc>, window_params = [{transform_indices = @transform_0, window_bounds = array<i64: 128, 128>}, {transform_indices = @transform_1, window_bounds = array<i64: 128, 1>}, {pipeline_mode = #tpu.pipeline_mode<synchronous>, transform_indices = @transform_2, window_bounds = array<i64: 128, 128>}, {transform_indices = @transform_3, window_bounds = array<i64: 128, 128>}]} {
    %c0 = arith.constant 0 : index
    %c0_0 = arith.constant 0 : index
    %0 = vector.load %arg1[%c0, %c0_0] : memref<128x128xf32, #tpu.memory_space<vmem>>, vector<128x128xf32>
    %c0_1 = arith.constant 0 : index
    %c0_2 = arith.constant 0 : index
    %1 = vector.load %arg2[%c0_1, %c0_2] : memref<128x1xf32, #tpu.memory_space<vmem>>, vector<128x1xf32>
    %2 = vector.broadcast %1 : vector<128x1xf32> to vector<128x128xf32>
    %3 = arith.mulf %0, %2 : vector<128x128xf32>
    %c0_3 = arith.constant 0 : index
    %c0_4 = arith.constant 0 : index
    %4 = vector.load %arg3[%c0_3, %c0_4] : memref<128x128xf32, #tpu.memory_space<vmem>>, vector<128x128xf32>
    %cst = arith.constant dense<0.000000e+00> : vector<128x128xf32>
    %5 = tpu.matmul %3, %4, %cst {dimension_numbers = #tpu.dot_dimension_numbers<[1], [0], [0], [1], [0, 0, 1, 1], [], []>} : vector<128x128xf32>, vector<128x128xf32>, vector<128x128xf32> -> vector<128x128xf32>
    %6 = arith.truncf %5 : vector<128x128xf32> to vector<128x128xbf16>
    %c0_5 = arith.constant 0 : index
    %c0_6 = arith.constant 0 : index
    %7 = vector.load %arg4[%c0_5, %c0_6] : memref<128x128xbf16, #tpu.memory_space<vmem>>, vector<128x128xbf16>
    tpu.vector_store %arg4[%c0_5, %c0_6], %6 {strides = array<i32>} : memref<128x128xbf16, #tpu.memory_space<vmem>>, vector<128x128xbf16>,
    return
  }
  func.func @transform_0(%arg0: i32) -> (i32, i32) {
    %c0_i32 = arith.constant 0 : i32
    %c0_i32_0 = arith.constant 0 : i32
    return %arg0, %c0_i32 : i32, i32
  }
  func.func @transform_1(%arg0: i32) -> (i32, i32) {
    %c0_i32 = arith.constant 0 : i32
    %c0_i32_0 = arith.constant 0 : i32
    return %arg0, %c0_i32 : i32, i32
  }
  func.func @transform_2(%arg0: i32) -> (i32, i32) {
    %c0_i32 = arith.constant 0 : i32
    %c0_i32_0 = arith.constant 0 : i32
    %c0_i32_1 = arith.constant 0 : i32
    return %c0_i32, %c0_i32_0 : i32, i32
  }
  func.func @transform_3(%arg0: i32) -> (i32, i32) {
    %c0_i32 = arith.constant 0 : i32
    %c0_i32_0 = arith.constant 0 : i32
    return %arg0, %c0_i32 : i32, i32
  }
}

</mosaic_0001>

<llo_original>
// kernel: tpu_custom_call.1
$region0: #{tpu_custom_call.1}
  #allocation0 [shape = 'u32[]', space=smem, size = 0x4, offset = 0x4, fixed_abs, tag = 'smem constant byte address 0x4 - core index']
  #allocation1 [shape = 'u32[72,128]{1,0:T(1,128)}', space=vmem, size = 0x9000, scoped, tag = 'internal scratch']
  %s0 = inlined_call_operand.vmem [shape: f32[128,128], index: 0, kind: input, shape index: {}]
  %s1 = inlined_call_operand.vmem [shape: f32[128,1], index: 1, kind: input, shape index: {}]
  %s2 = inlined_call_operand.hbm [shape: f32[128,128], index: 2, kind: input, shape index: {}]
  %s3 = inlined_call_operand.hbm [shape: bf16[128,128], index: 3, kind: output, shape index: {}]
  %s4 = sld [smem:[#allocation0]]
  $region26: #{tpu_custom_call.1} parent=0
    _
  %s6 = ssub.s32 1, %s4
  %s7 = scalar_select 0, %s6, %s4
  $region1: #{tpu_custom_call.1} parent=0
    #allocation2 [shape = 'u8[65536]{0}', space=vmem, size = 0x10000, scoped, tag = 'input window, operand 2, single buffered']
    #allocation3 [shape = 's32[1]{0}', space=sflag, size = 0x4, scoped, tag = 'scoped memory for tpu_custom_call.1']
    #allocation4 [shape = 's32[1]{0}', space=sflag, size = 0x4, scoped, tag = 'scoped memory for tpu_custom_call.1']
    #allocation5 [shape = 'u8[32768]{0}', space=vmem, size = 0x8000, scoped, tag = 'output window, operand 0, single buffered']
    %8 = vsyncpa [#allocation3], 0
    %9 = vsyncpa [#allocation4], 0
    // Predicated region
    $region2: #{tpu_custom_call.1} parent=1 // pred_check
      _
    $region3: #{tpu_custom_call.1} parent=1 // pred_check_branch
      %11 = sbr.rel (0) target = $region5
    $region4: #{tpu_custom_call.1} parent=1 // pred_region
      _
    $region5: #{tpu_custom_call.1} parent=1 // pred_fallthru
      _
    // Predicated region
    $region6: #{tpu_custom_call.1} parent=1 // pred_check
      _
    $region7: #{tpu_custom_call.1} parent=1 // pred_check_branch
      %13 = sbr.rel (0) target = $region9
    $region8: #{tpu_custom_call.1} parent=1 // pred_region
      _
    $region9: #{tpu_custom_call.1} parent=1 // pred_fallthru
      _
    // Predicated region
    $region10: #{tpu_custom_call.1} parent=1 // pred_check
      _
    $region11: #{tpu_custom_call.1} parent=1 // pred_check_branch
      %15 = sbr.rel (0) target = $region13
    $region12: #{tpu_custom_call.1} parent=1 // pred_region
      %17 = vsyncadd [#allocation3], 0
      %s18 = sshll.u32 %s2, 4
      %s19 = int_to_ptr.hbm [resolvable:$true] %s18
      %s20 = sshll.u32 [#allocation2], 4
      %s21 = int_to_ptr.vmem [resolvable:$true] %s20
      %26 = dma.hbm_to_vmem [thread:$0]  %s19, 2048, %s21, [#allocation3], 128, 128, 8
    $region13: #{tpu_custom_call.1} parent=1 // pred_fallthru
      _
    // Predicated region
    $region14: #{tpu_custom_call.1} parent=1 // pred_check
      _
    $region15: #{tpu_custom_call.1} parent=1 // pred_check_branch
      %28 = sbr.rel (0) target = $region17
    $region16: #{tpu_custom_call.1} parent=1 // pred_region
      %30 = dma.done [#allocation3], 2048
    $region17: #{tpu_custom_call.1} parent=1 // pred_fallthru
      _
    %v31 = vld [vmem:[%s0] sm:$0xff]
    %v32 = vld [vmem:[%s0 + $0x8] sm:$0xff]
    %v33 = vld [vmem:[%s0 + $0x10] sm:$0xff]
    %v34 = vld [vmem:[%s0 + $0x18] sm:$0xff]
    %v35 = vld [vmem:[%s0 + $0x20] sm:$0xff]
    %v36 = vld [vmem:[%s0 + $0x28] sm:$0xff]
    %v37 = vld [vmem:[%s0 + $0x30] sm:$0xff]
    %v38 = vld [vmem:[%s0 + $0x38] sm:$0xff]
    %v39 = vld [vmem:[%s0 + $0x40] sm:$0xff]
    %v40 = vld [vmem:[%s0 + $0x48] sm:$0xff]
    %v41 = vld [vmem:[%s0 + $0x50] sm:$0xff]
    %v42 = vld [vmem:[%s0 + $0x58] sm:$0xff]
    %v43 = vld [vmem:[%s0 + $0x60] sm:$0xff]
    %v44 = vld [vmem:[%s0 + $0x68] sm:$0xff]
    %v45 = vld [vmem:[%s0 + $0x70] sm:$0xff]
    %v46 = vld [vmem:[%s0 + $0x78] sm:$0xff]
    %v47 = vld [vmem:[%s1] sm:$0xff]
    %v48 = vld [vmem:[%s1 + $0x8] sm:$0xff]
    %v49 = vld [vmem:[%s1 + $0x10] sm:$0xff]
    %v50 = vld [vmem:[%s1 + $0x18] sm:$0xff]
    %v51 = vld [vmem:[%s1 + $0x20] sm:$0xff]
    %v52 = vld [vmem:[%s1 + $0x28] sm:$0xff]
    %v53 = vld [vmem:[%s1 + $0x30] sm:$0xff]
    %v54 = vld [vmem:[%s1 + $0x38] sm:$0xff]
    %v55 = vld [vmem:[%s1 + $0x40] sm:$0xff]
    %v56 = vld [vmem:[%s1 + $0x48] sm:$0xff]
    %v57 = vld [vmem:[%s1 + $0x50] sm:$0xff]
    %v58 = vld [vmem:[%s1 + $0x58] sm:$0xff]
    %v59 = vld [vmem:[%s1 + $0x60] sm:$0xff]
    %v60 = vld [vmem:[%s1 + $0x68] sm:$0xff]
    %v61 = vld [vmem:[%s1 + $0x70] sm:$0xff]
    %v62 = vld [vmem:[%s1 + $0x78] sm:$0xff]
    %64 = vset.pattern.permute.xlu0 0
    %65 = vperm.xlu0 %64, %v47
    %v66 = vpop.permute.xlu0 %65
    %69 = vset.pattern.permute.xlu0 0
    %70 = vperm.xlu0 %69, %v48
    %v71 = vpop.permute.xlu0 %70
    %74 = vset.pattern.permute.xlu0 0
    %75 = vperm.xlu0 %74, %v49
    %v76 = vpop.permute.xlu0 %75
    %79 = vset.pattern.permute.xlu0 0
    %80 = vperm.xlu0 %79, %v50
    %v81 = vpop.permute.xlu0 %80
    %84 = vset.pattern.permute.xlu0 0
    %85 = vperm.xlu0 %84, %v51
    %v86 = vpop.permute.xlu0 %85
    %89 = vset.pattern.permute.xlu0 0
    %90 = vperm.xlu0 %89, %v52
    %v91 = vpop.permute.xlu0 %90
    %94 = vset.pattern.permute.xlu0 0
    %95 = vperm.xlu0 %94, %v53
    %v96 = vpop.permute.xlu0 %95
    %99 = vset.pattern.permute.xlu0 0
    %100 = vperm.xlu0 %99, %v54
    %v101 = vpop.permute.xlu0 %100
    %104 = vset.pattern.permute.xlu0 0
    %105 = vperm.xlu0 %104, %v55
    %v106 = vpop.permute.xlu0 %105
    %109 = vset.pattern.permute.xlu0 0
    %110 = vperm.xlu0 %109, %v56
    %v111 = vpop.permute.xlu0 %110
    %114 = vset.pattern.permute.xlu0 0
    %115 = vperm.xlu0 %114, %v57
    %v116 = vpop.permute.xlu0 %115
    %119 = vset.pattern.permute.xlu0 0
    %120 = vperm.xlu0 %119, %v58
    %v121 = vpop.permute.xlu0 %120
    %124 = vset.pattern.permute.xlu0 0
    %125 = vperm.xlu0 %124, %v59
    %v126 = vpop.permute.xlu0 %125
    %129 = vset.pattern.permute.xlu0 0
    %130 = vperm.xlu0 %129, %v60
    %v131 = vpop.permute.xlu0 %130
    %134 = vset.pattern.permute.xlu0 0
    %135 = vperm.xlu0 %134, %v61
    %v136 = vpop.permute.xlu0 %135
    %139 = vset.pattern.permute.xlu0 0
    %140 = vperm.xlu0 %139, %v62
    %v141 = vpop.permute.xlu0 %140
    %v143 = vmul.f32 %v31, %v66
    %v144 = vmul.f32 %v32, %v71
    %v145 = vmul.f32 %v33, %v76
    %v146 = vmul.f32 %v34, %v81
    %v147 = vmul.f32 %v35, %v86
    %v148 = vmul.f32 %v36, %v91
    %v149 = vmul.f32 %v37, %v96
    %v150 = vmul.f32 %v38, %v101
    %v151 = vmul.f32 %v39, %v106
    %v152 = vmul.f32 %v40, %v111
    %v153 = vmul.f32 %v41, %v116
    %v154 = vmul.f32 %v42, %v121
    %v155 = vmul.f32 %v43, %v126
    %v156 = vmul.f32 %v44, %v131
    %v157 = vmul.f32 %v45, %v136
    %v158 = vmul.f32 %v46, %v141
    %v159 = vld [vmem:[#allocation2] sm:$0xff]
    %v160 = vld [vmem:[#allocation2 + $0x8] sm:$0xff]
    %v161 = vld [vmem:[#allocation2 + $0x10] sm:$0xff]
    %v162 = vld [vmem:[#allocation2 + $0x18] sm:$0xff]
    %v163 = vld [vmem:[#allocation2 + $0x20] sm:$0xff]
    %v164 = vld [vmem:[#allocation2 + $0x28] sm:$0xff]
    %v165 = vld [vmem:[#allocation2 + $0x30] sm:$0xff]
    %v166 = vld [vmem:[#allocation2 + $0x38] sm:$0xff]
    %v167 = vld [vmem:[#allocation2 + $0x40] sm:$0xff]
    %v168 = vld [vmem:[#allocation2 + $0x48] sm:$0xff]
    %v169 = vld [vmem:[#allocation2 + $0x50] sm:$0xff]
    %v170 = vld [vmem:[#allocation2 + $0x58] sm:$0xff]
    %v171 = vld [vmem:[#allocation2 + $0x60] sm:$0xff]
    %v172 = vld [vmem:[#allocation2 + $0x68] sm:$0xff]
    %v173 = vld [vmem:[#allocation2 + $0x70] sm:$0xff]
    %v174 = vld [vmem:[#allocation2 + $0x78] sm:$0xff]
    %175 = vmatpush.msra.mxu0 %v174
    %176 = vmatpush.msra.mxu0 %v173
    %177 = vmatpush.msra.mxu0 %v172
    %178 = vmatpush.msra.mxu0 %v171
    %179 = vmatpush.msra.mxu0 %v170
    %180 = vmatpush.msra.mxu0 %v169
    %181 = vmatpush.msra.mxu0 %v168
    %182 = vmatpush.msra.mxu0 %v167
    %183 = vmatpush.msra.mxu0 %v166
    %184 = vmatpush.msra.mxu0 %v165
    %185 = vmatpush.msra.mxu0 %v164
    %186 = vmatpush.msra.mxu0 %v163
    %187 = vmatpush.msra.mxu0 %v162
    %188 = vmatpush.msra.mxu0 %v161
    %189 = vmatpush.msra.mxu0 %v160
    %190 = vmatpush.msra.mxu0 %v159
    %191 = vmatmul.f32.gmra.mxu0 %v143
    %v192 = vpop.f32.mrf.mxu0
    %v193 = vadd.f32 0.0, %v192
    %194 = vmatmul.f32.gmra.mxu0 %v144
    %v195 = vpop.f32.mrf.mxu0
    %v196 = vadd.f32 0.0, %v195
    %197 = vmatmul.f32.gmra.mxu0 %v145
    %v198 = vpop.f32.mrf.mxu0
    %v199 = vadd.f32 0.0, %v198
    %200 = vmatmul.f32.gmra.mxu0 %v146
    %v201 = vpop.f32.mrf.mxu0
    %v202 = vadd.f32 0.0, %v201
    %203 = vmatmul.f32.gmra.mxu0 %v147
    %v204 = vpop.f32.mrf.mxu0
    %v205 = vadd.f32 0.0, %v204
    %206 = vmatmul.f32.gmra.mxu0 %v148
    %v207 = vpop.f32.mrf.mxu0
    %v208 = vadd.f32 0.0, %v207
    %209 = vmatmul.f32.gmra.mxu0 %v149
    %v210 = vpop.f32.mrf.mxu0
    %v211 = vadd.f32 0.0, %v210
    %212 = vmatmul.f32.gmra.mxu0 %v150
    %v213 = vpop.f32.mrf.mxu0
    %v214 = vadd.f32 0.0, %v213
    %215 = vmatmul.f32.gmra.mxu0 %v151
    %v216 = vpop.f32.mrf.mxu0
    %v217 = vadd.f32 0.0, %v216
    %218 = vmatmul.f32.gmra.mxu0 %v152
    %v219 = vpop.f32.mrf.mxu0
    %v220 = vadd.f32 0.0, %v219
    %221 = vmatmul.f32.gmra.mxu0 %v153
    %v222 = vpop.f32.mrf.mxu0
    %v223 = vadd.f32 0.0, %v222
    %224 = vmatmul.f32.gmra.mxu0 %v154
    %v225 = vpop.f32.mrf.mxu0
    %v226 = vadd.f32 0.0, %v225
    %227 = vmatmul.f32.gmra.mxu0 %v155
    %v228 = vpop.f32.mrf.mxu0
    %v229 = vadd.f32 0.0, %v228
    %230 = vmatmul.f32.gmra.mxu0 %v156
    %v231 = vpop.f32.mrf.mxu0
    %v232 = vadd.f32 0.0, %v231
    %233 = vmatmul.f32.gmra.mxu0 %v157
    %v234 = vpop.f32.mrf.mxu0
    %v235 = vadd.f32 0.0, %v234
    %236 = vmatmul.f32.gmra.mxu0 %v158
    %v237 = vpop.f32.mrf.mxu0
    %v238 = vadd.f32 0.0, %v237
    %239 = vdwg.mxu0
    %v240 = vpack.c.bf16 %v193, %v193
    %v241 = vpack.c.bf16 %v196, %v196
    %v242 = vpack.c.bf16 %v199, %v199
    %v243 = vpack.c.bf16 %v202, %v202
    %v244 = vpack.c.bf16 %v205, %v205
    %v245 = vpack.c.bf16 %v208, %v208
    %v246 = vpack.c.bf16 %v211, %v211
    %v247 = vpack.c.bf16 %v214, %v214
    %v248 = vpack.c.bf16 %v217, %v217
    %v249 = vpack.c.bf16 %v220, %v220
    %v250 = vpack.c.bf16 %v223, %v223
    %v251 = vpack.c.bf16 %v226, %v226
    %v252 = vpack.c.bf16 %v229, %v229
    %v253 = vpack.c.bf16 %v232, %v232
    %v254 = vpack.c.bf16 %v235, %v235
    %v255 = vpack.c.bf16 %v238, %v238
    %256 = vst [vmem:[#allocation5] sm:$0xf] %v240
    %257 = vst [vmem:[#allocation5 + $0x4] sm:$0xf] %v241
    %258 = vst [vmem:[#allocation5 + $0x8] sm:$0xf] %v242
    %259 = vst [vmem:[#allocation5 + $0xc] sm:$0xf] %v243
    %260 = vst [vmem:[#allocation5 + $0x10] sm:$0xf] %v244
    %261 = vst [vmem:[#allocation5 + $0x14] sm:$0xf] %v245
    %262 = vst [vmem:[#allocation5 + $0x18] sm:$0xf] %v246
    %263 = vst [vmem:[#allocation5 + $0x1c] sm:$0xf] %v247
    %264 = vst [vmem:[#allocation5 + $0x20] sm:$0xf] %v248
    %265 = vst [vmem:[#allocation5 + $0x24] sm:$0xf] %v249
    %266 = vst [vmem:[#allocation5 + $0x28] sm:$0xf] %v250
    %267 = vst [vmem:[#allocation5 + $0x2c] sm:$0xf] %v251
    %268 = vst [vmem:[#allocation5 + $0x30] sm:$0xf] %v252
    %269 = vst [vmem:[#allocation5 + $0x34] sm:$0xf] %v253
    %270 = vst [vmem:[#allocation5 + $0x38] sm:$0xf] %v254
    %271 = vst [vmem:[#allocation5 + $0x3c] sm:$0xf] %v255
    // Predicated region
    $region18: #{tpu_custom_call.1} parent=1 // pred_check
      _
    $region19: #{tpu_custom_call.1} parent=1 // pred_check_branch
      %273 = sbr.rel (0) target = $region21
    $region20: #{tpu_custom_call.1} parent=1 // pred_region
      %275 = vsyncadd [#allocation4], 0
      %s276 = sshll.u32 [#allocation5], 4
      %s277 = int_to_ptr.vmem [resolvable:$true] %s276
      %s278 = sshll.u32 %s3, 4
      %s279 = int_to_ptr.hbm [resolvable:$true] %s278
      %284 = dma.vmem_to_hbm [thread:$0]  %s277, 1024, %s279, [#allocation4], 64, 64, 4
    $region21: #{tpu_custom_call.1} parent=1 // pred_fallthru
      _
    // Predicated region
    $region22: #{tpu_custom_call.1} parent=1 // pred_check
      _
    $region23: #{tpu_custom_call.1} parent=1 // pred_check_branch
      %286 = sbr.rel (0) target = $region25
    $region24: #{tpu_custom_call.1} parent=1 // pred_region
      %288 = dma.done [#allocation4], 1024
    $region25: #{tpu_custom_call.1} parent=1 // pred_fallthru
      _
    %289 = vsyncpa [#allocation3], 1
    %290 = vsyncpa [#allocation4], 1

</llo_original>
